<compile_context>
chip_gen: v7x
topology: tpu7x:2x2x1
jax: 0.10.0
libtpu: 0.0.40
codegen_flags: <defaults>
</compile_context>

<pallas_src>
import functools

import jax
import jax.numpy as jnp
from jax.experimental import pallas as pl
from jax.experimental.pallas import tpu as pltpu

_LANE = 128


# --------------------------------------------------------------------------- #
# Kernels
# --------------------------------------------------------------------------- #
def _fused_kernel(x_ref, w_ref, b_ref, o_ref):
    """Average pool folded into the FC: one lane-dense MXU matmul + softmax.

    x_ref: (TB, CHW)   native dtype, pipelined batch tile
    w_ref: (CHW, Npad) float32, resident (weight.T expanded over HW with 1/HW folded in)
    b_ref: (1, Npad)   float32, resident (padded classes = -1e30)
    o_ref: (TB, Npad)  input dtype, lane-dense output tile
    """
    logits = jnp.dot(x_ref[...].astype(jnp.float32), w_ref[...],
                     preferred_element_type=jnp.float32) + b_ref[...]
    m = jnp.max(logits, axis=-1, keepdims=True)
    e = jnp.exp(logits - m)
    o_ref[...] = (e / jnp.sum(e, axis=-1, keepdims=True)).astype(o_ref.dtype)


def _pooled_kernel(x_ref, w_ref, b_ref, o_ref, acc_ref, *,
                   inv_hw, hw_total, hw_chunk):
    """Streaming global-avg-pool over a (batch, spatial) grid + FC/softmax epilogue.

    x_ref:   (TB, C, HWc) native dtype, pipelined tile
    w_ref:   (C, Npad)    float32, resident (pre-transposed nn.Linear weight)
    b_ref:   (1, Npad)    float32, resident
    o_ref:   (TB, Npad)   input dtype; written on the last spatial step only
    acc_ref: (TB, C)      float32 VMEM scratch (partial spatial sums)
    """
    h = pl.program_id(1)
    nh = pl.num_programs(1)

    @pl.when(h == 0)
    def _():
        acc_ref[...] = jnp.zeros_like(acc_ref)

    x = x_ref[...]
    if hw_total % hw_chunk != 0:
        # Ragged last spatial chunk: out-of-range lanes hold garbage -> mask them
        # before they enter the reduction.
        valid = hw_total - h * hw_chunk
        col = jax.lax.broadcasted_iota(jnp.int32, x.shape, dimension=2)
        x = jnp.where(col < valid, x, jnp.zeros_like(x))

    # dtype=f32 fuses the (possible) upcast into the reduction -> no full-tile f32 copy.
    acc_ref[...] += jnp.sum(x, axis=-1, dtype=jnp.float32)

    @pl.when(h == nh - 1)
    def _():
        pooled = acc_ref[...] * inv_hw                                   # (TB, C)
        logits = jnp.dot(pooled, w_ref[...],
                         preferred_element_type=jnp.float32) + b_ref[...]
        m = jnp.max(logits, axis=-1, keepdims=True)
        e = jnp.exp(logits - m)
        o_ref[...] = (e / jnp.sum(e, axis=-1, keepdims=True)).astype(o_ref.dtype)


# --------------------------------------------------------------------------- #
# Wrapper
# --------------------------------------------------------------------------- #
def _vmem_plan():
    """Generation-aware VMEM plan (v5e/v6e: 128 MiB physical, v7x: 64 MiB per TC)."""
    try:
        phys = int(getattr(pltpu.get_tpu_info(), "vmem_capacity_bytes",
                           64 * 1024 * 1024))
    except Exception:
        phys = 64 * 1024 * 1024                      # conservative (v7x-sized)
    vmem_limit = (phys * 3) // 4                     # leave compiler headroom
    x_tile_budget = int(vmem_limit * 0.35)           # double-buffered x -> ~70% of limit
    return int(vmem_limit), x_tile_budget


def output_block(x_nchw, weight, bias, *, fused_weight_budget=2 * 1024 * 1024):
    """x_nchw: (B, C, H, W); weight: (num_classes, C); bias: (num_classes,)."""
    B, C, H, W = x_nchw.shape
    num_classes = weight.shape[0]
    HW = H * W
    CHW = C * HW
    itemsize = jnp.dtype(x_nchw.dtype).itemsize
    out_dtype = x_nchw.dtype

    vmem_limit, x_tile_budget = _vmem_plan()

    # Lane-dense class dim (exactly 128 when num_classes <= 128). Padded weight
    # columns are 0 and padded bias entries -1e30 -> padded softmax weight is 0.
    npad = max(_LANE, pl.cdiv(num_classes, _LANE) * _LANE)
    b2d = jnp.full((1, npad), -1e30, jnp.float32).at[0, :num_classes].set(
        bias.astype(jnp.float32))
    w_f32 = weight.astype(jnp.float32)

    if CHW * npad * 4 <= fused_weight_budget:
        # ---- Path A: fold the average pool into the FC (single MXU matmul). ----
        x2d = x_nchw.reshape(B, CHW)                 # free reshape (contiguous NCHW)
        w_fused = jnp.zeros((CHW, npad), jnp.float32).at[:, :num_classes].set(
            jnp.repeat(w_f32.T, HW, axis=0) / float(HW))

        row_bytes = pl.cdiv(CHW, _LANE) * _LANE * itemsize
        tb_fit = max(1, x_tile_budget // row_bytes)
        tb = B if tb_fit >= B else max(8, (tb_fit // 8) * 8)
        if tb == B and B >= 16:                      # >=2 grid steps so v7x's 2 TCs both stream
            tb = max(8, pl.cdiv(pl.cdiv(B, 2), 8) * 8)
        grid = (pl.cdiv(B, tb),)                     # ragged last block: partial stores masked

        cost = pl.CostEstimate(
            flops=2 * B * CHW * npad,
            transcendentals=B * npad,
            bytes_accessed=B * CHW * itemsize + CHW * npad * 4 + B * npad * itemsize)

        out = pl.pallas_call(
            _fused_kernel,
            out_shape=jax.ShapeDtypeStruct((B, npad), out_dtype),
            grid=grid,
            in_specs=[
                pl.BlockSpec((tb, CHW), lambda i: (i, 0)),      # pipelined batch tiles
                pl.BlockSpec((CHW, npad), lambda i: (0, 0)),    # resident fused weight
                pl.BlockSpec((1, npad), lambda i: (0, 0)),      # resident bias
            ],
            out_specs=pl.BlockSpec((tb, npad), lambda i: (i, 0)),
            compiler_params=pltpu.CompilerParams(
                dimension_semantics=("parallel",),
                vmem_limit_bytes=vmem_limit),
            cost_estimate=cost,
        )(x2d, w_fused, b2d)
        return out[:, :num_classes]

    # ---- Path B: streaming pool over a (batch, spatial) grid + FC/softmax. ----
    x3d = x_nchw.reshape(B, C, HW)
    w_t = jnp.zeros((C, npad), jnp.float32).at[:, :num_classes].set(w_f32.T)

    sub = (8 * 4) // itemsize                        # sublane multiple: 8 f32 / 16 bf16 / 32 i8
    c_pad = pl.cdiv(C, sub) * sub
    min_rows = min(B, 8)

    def tile_bytes(hw_c):                            # padded VMEM footprint of one row tile
        return c_pad * (pl.cdiv(hw_c, _LANE) * _LANE) * itemsize

    hw_chunk = HW
    if min_rows * tile_bytes(HW) > x_tile_budget:
        # Even the minimum batch tile doesn't fit: add a spatial grid axis.
        hw_chunk = max(_LANE, (x_tile_budget // (min_rows * c_pad * itemsize))
                       // _LANE * _LANE)
        # TODO(synk): if 8 * c_pad * 128 * itemsize still exceeds VMEM (huge C),
        # a channel-split accumulation axis would be needed as well.
    row_bytes = tile_bytes(hw_chunk)
    tb_fit = max(1, x_tile_budget // row_bytes)
    tb = B if tb_fit >= B else max(8, (tb_fit // 8) * 8)
    if tb == B and B >= 16:                          # >=2 grid steps for v7x's 2 TensorCores
        tb = max(8, pl.cdiv(pl.cdiv(B, 2), 8) * 8)

    nb = pl.cdiv(B, tb)
    nh = pl.cdiv(HW, hw_chunk)

    kernel = functools.partial(_pooled_kernel, inv_hw=1.0 / float(HW),
                               hw_total=HW, hw_chunk=hw_chunk)

    cost = pl.CostEstimate(
        flops=B * CHW + 2 * B * C * npad,
        transcendentals=B * npad,
        bytes_accessed=B * CHW * itemsize + C * npad * 4 + B * npad * itemsize)

    out = pl.pallas_call(
        kernel,
        out_shape=jax.ShapeDtypeStruct((B, npad), out_dtype),
        grid=(nb, nh),                               # reduction (spatial) axis last
        in_specs=[
            pl.BlockSpec((tb, C, hw_chunk), lambda b, h: (b, 0, h)),  # pipelined tiles
            pl.BlockSpec((C, npad), lambda b, h: (0, 0)),             # resident weight
            pl.BlockSpec((1, npad), lambda b, h: (0, 0)),             # resident bias
        ],
        out_specs=pl.BlockSpec((tb, npad), lambda b, h: (b, 0)),
        scratch_shapes=[pltpu.VMEM((tb, C), jnp.float32)],
        compiler_params=pltpu.CompilerParams(
            dimension_semantics=("parallel", "arbitrary"),
            vmem_limit_bytes=vmem_limit),
        cost_estimate=cost,
    )(x3d, w_t, b2d)
    return out[:, :num_classes]


if __name__ == "__main__":
    key = jax.random.PRNGKey(0)
    kx, kw, kb, kx2, kw2, kb2 = jax.random.split(key, 6)

    # Small shapes consistent with the module's forward (exercises the fused path).
    B, C, H, W = 2, 4, 16, 16
    num_classes = 8
    x = jax.random.normal(kx, (B, C, H, W), dtype=jnp.float32)
    weight = jax.random.normal(kw, (num_classes, C), dtype=jnp.float32) * 0.1
    bias = jax.random.normal(kb, (num_classes,), dtype=jnp.float32) * 0.1

    out = jax.block_until_ready(output_block(x, weight, bias))
    probs_ref = jax.nn.softmax(jnp.mean(x, axis=(2, 3)) @ weight.T + bias, axis=1)
    assert out.shape == (B, num_classes)
    assert jnp.allclose(out, probs_ref, atol=1e-3, rtol=1e-3)
    assert jnp.allclose(jnp.sum(out, axis=1), 1.0, atol=1e-3)

    # Slightly larger head: exercises the streaming-pool (batch x spatial grid) path.
    B2, C2, H2, W2 = 4, 16, 32, 32
    nc2 = 10
    x2 = jax.random.normal(kx2, (B2, C2, H2, W2), dtype=jnp.float32)
    w2 = jax.random.normal(kw2, (nc2, C2), dtype=jnp.float32) * 0.1
    b2 = jax.random.normal(kb2, (nc2,), dtype=jnp.float32) * 0.1

    out2 = jax.block_until_ready(output_block(x2, w2, b2))
    probs_ref2 = jax.nn.softmax(jnp.mean(x2, axis=(2, 3)) @ w2.T + b2, axis=1)
    assert out2.shape == (B2, nc2)
    assert jnp.allclose(out2, probs_ref2, atol=1e-3, rtol=1e-3)
    assert jnp.allclose(jnp.sum(out2, axis=1), 1.0, atol=1e-3)

    print("KERNEL_OK")
</pallas_src>

<mosaic_0001>
module attributes {stable_mosaic.version = 11 : i64} {
  func.func @_fused_kernel(%arg0: i32, %arg1: memref<2x1024xf32, #tpu.memory_space<vmem>>, %arg2: memref<1024x128xf32, #tpu.memory_space<vmem>>, %arg3: memref<1x128xf32, #tpu.memory_space<vmem>>, %arg4: memref<2x128xf32, #tpu.memory_space<vmem>>) attributes {dimension_semantics = [#tpu.dimension_semantics<parallel>], iteration_bounds = array<i64: 1>, scalar_prefetch = 0 : i64, scratch_operands = 0 : i64, tpu.core_type = #tpu.core_type<tc>, window_params = [{transform_indices = @transform_0, window_bounds = array<i64: 2, 1024>}, {pipeline_mode = #tpu.pipeline_mode<synchronous>, transform_indices = @transform_1, window_bounds = array<i64: 1024, 128>}, {pipeline_mode = #tpu.pipeline_mode<synchronous>, transform_indices = @transform_2, window_bounds = array<i64: 1, 128>}, {transform_indices = @transform_3, window_bounds = array<i64: 2, 128>}]} {
    %c0 = arith.constant 0 : index
    %c0_0 = arith.constant 0 : index
    %0 = vector.load %arg1[%c0, %c0_0] : memref<2x1024xf32, #tpu.memory_space<vmem>>, vector<2x1024xf32>
    %c0_1 = arith.constant 0 : index
    %c0_2 = arith.constant 0 : index
    %1 = vector.load %arg2[%c0_1, %c0_2] : memref<1024x128xf32, #tpu.memory_space<vmem>>, vector<1024x128xf32>
    %cst = arith.constant dense<0.000000e+00> : vector<2x128xf32>
    %2 = tpu.matmul %0, %1, %cst {dimension_numbers = #tpu.dot_dimension_numbers<[1], [0], [0], [1], [0, 0, 1, 1], [], []>} : vector<2x1024xf32>, vector<1024x128xf32>, vector<2x128xf32> -> vector<2x128xf32>
    %c0_3 = arith.constant 0 : index
    %c0_4 = arith.constant 0 : index
    %3 = vector.load %arg3[%c0_3, %c0_4] : memref<1x128xf32, #tpu.memory_space<vmem>>, vector<1x128xf32>
    %4 = vector.broadcast %3 : vector<1x128xf32> to vector<2x128xf32>
    %5 = arith.addf %2, %4 : vector<2x128xf32>
    %cst_5 = arith.constant dense<0xFF800000> : vector<2xf32>
    %6 = vector.multi_reduction <maximumf>, %5, %cst_5 [1] : vector<2x128xf32> to vector<2xf32>
    %7 = vector.shape_cast %6 : vector<2xf32> to vector<2x1xf32>
    %8 = vector.broadcast %7 : vector<2x1xf32> to vector<2x128xf32>
    %9 = arith.subf %5, %8 : vector<2x128xf32>
    %10 = math.exp %9 : vector<2x128xf32>
    %cst_6 = arith.constant dense<0.000000e+00> : vector<2xf32>
    %11 = vector.multi_reduction <add>, %10, %cst_6 [1] : vector<2x128xf32> to vector<2xf32>
    %12 = vector.shape_cast %11 : vector<2xf32> to vector<2x1xf32>
    %13 = vector.broadcast %12 : vector<2x1xf32> to vector<2x128xf32>
    %14 = arith.divf %10, %13 : vector<2x128xf32>
    %c0_7 = arith.constant 0 : index
    %c0_8 = arith.constant 0 : index
    %15 = vector.load %arg4[%c0_7, %c0_8] : memref<2x128xf32, #tpu.memory_space<vmem>>, vector<2x128xf32>
    tpu.vector_store %arg4[%c0_7, %c0_8], %14 {strides = array<i32>} : memref<2x128xf32, #tpu.memory_space<vmem>>, vector<2x128xf32>,
    return
  }
  func.func @transform_0(%arg0: i32) -> (i32, i32) {
    %c0_i32 = arith.constant 0 : i32
    %c0_i32_0 = arith.constant 0 : i32
    return %arg0, %c0_i32 : i32, i32
  }
  func.func @transform_1(%arg0: i32) -> (i32, i32) {
    %c0_i32 = arith.constant 0 : i32
    %c0_i32_0 = arith.constant 0 : i32
    %c0_i32_1 = arith.constant 0 : i32
    return %c0_i32, %c0_i32_0 : i32, i32
  }
  func.func @transform_2(%arg0: i32) -> (i32, i32) {
    %c0_i32 = arith.constant 0 : i32
    %c0_i32_0 = arith.constant 0 : i32
    %c0_i32_1 = arith.constant 0 : i32
    return %c0_i32, %c0_i32_0 : i32, i32
  }
  func.func @transform_3(%arg0: i32) -> (i32, i32) {
    %c0_i32 = arith.constant 0 : i32
    %c0_i32_0 = arith.constant 0 : i32
    return %arg0, %c0_i32 : i32, i32
  }
}

</mosaic_0001>

<llo_original>
// kernel: tpu_custom_call.1
$region0: #{tpu_custom_call.1}
  #allocation0 [shape = 'u32[]', space=smem, size = 0x4, offset = 0x4, fixed_abs, tag = 'smem constant byte address 0x4 - core index']
  #allocation1 [shape = 'u32[144,128]{1,0:T(1,128)}', space=vmem, size = 0x12000, scoped, tag = 'internal scratch']
  %s0 = inlined_call_operand.hbm [shape: f32[2,1024], index: 0, kind: input, shape index: {}]
  %s1 = inlined_call_operand.hbm [shape: f32[1024,128], index: 1, kind: input, shape index: {}]
  %s2 = inlined_call_operand.vmem [shape: f32[1,128], index: 2, kind: input, shape index: {}]
  %s3 = inlined_call_operand.hbm [shape: f32[2,128], index: 3, kind: output, shape index: {}]
  %s4 = sld [smem:[#allocation0]]
  $region30: #{tpu_custom_call.1} parent=0
    _
  %s6 = ssub.s32 1, %s4
  %s7 = scalar_select 0, %s6, %s4
  $region1: #{tpu_custom_call.1} parent=0
    #allocation2 [shape = 'u8[8192]{0}', space=vmem, size = 0x2000, scoped, tag = 'input window, operand 0, single buffered']
    #allocation3 [shape = 's32[1]{0}', space=sflag, size = 0x4, scoped, tag = 'scoped memory for tpu_custom_call.1']
    #allocation4 [shape = 's32[1]{0}', space=sflag, size = 0x4, scoped, tag = 'scoped memory for tpu_custom_call.1']
    #allocation5 [shape = 'u8[524288]{0}', space=vmem, size = 0x80000, scoped, tag = 'input window, operand 1, single buffered']
    #allocation6 [shape = 's32[1]{0}', space=sflag, size = 0x4, scoped, tag = 'scoped memory for tpu_custom_call.1']
    #allocation7 [shape = 'u8[1024]{0}', space=vmem, size = 0x400, scoped, tag = 'output window, operand 0, single buffered']
    %8 = vsyncpa [#allocation3], 0
    %9 = vsyncpa [#allocation6], 0
    %10 = vsyncpa [#allocation4], 0
    // Predicated region
    $region2: #{tpu_custom_call.1} parent=1 // pred_check
      _
    $region3: #{tpu_custom_call.1} parent=1 // pred_check_branch
      %12 = sbr.rel (0) target = $region5
    $region4: #{tpu_custom_call.1} parent=1 // pred_region
      %s14 = ssub.s32 256, 256
      %15 = vsyncadd [#allocation3], %s14
      %s17 = sshll.u32 [#allocation2], 4
      %s18 = int_to_ptr.vmem [resolvable:$true] %s17
      %20 = dma.hbm_to_vmem [thread:$0]  %s0, 256, %s18, [#allocation3]
    $region5: #{tpu_custom_call.1} parent=1 // pred_fallthru
      _
    // Predicated region
    $region6: #{tpu_custom_call.1} parent=1 // pred_check
      _
    $region7: #{tpu_custom_call.1} parent=1 // pred_check_branch
      %22 = sbr.rel (0) target = $region9
    $region8: #{tpu_custom_call.1} parent=1 // pred_region
      %s24 = ssub.s32 16384, 16384
      %25 = vsyncadd [#allocation6], %s24
      %s26 = sshll.u32 [#allocation5], 4
      %s27 = int_to_ptr.vmem [resolvable:$true] %s26
      %32 = dma.hbm_to_vmem [thread:$0]  %s1, 16384, %s27, [#allocation6], 128, 128, 8
    $region9: #{tpu_custom_call.1} parent=1 // pred_fallthru
      _
    // Predicated region
    $region10: #{tpu_custom_call.1} parent=1 // pred_check
      _
    $region11: #{tpu_custom_call.1} parent=1 // pred_check_branch
      %34 = sbr.rel (0) target = $region13
    $region12: #{tpu_custom_call.1} parent=1 // pred_region
      _
    $region13: #{tpu_custom_call.1} parent=1 // pred_fallthru
      _
    // Predicated region
    $region14: #{tpu_custom_call.1} parent=1 // pred_check
      _
    $region15: #{tpu_custom_call.1} parent=1 // pred_check_branch
      %36 = sbr.rel (0) target = $region17
    $region16: #{tpu_custom_call.1} parent=1 // pred_region
      %37 = dma.done [#allocation3], 256
    $region17: #{tpu_custom_call.1} parent=1 // pred_fallthru
      _
    // Predicated region
    $region18: #{tpu_custom_call.1} parent=1 // pred_check
      _
    $region19: #{tpu_custom_call.1} parent=1 // pred_check_branch
      %39 = sbr.rel (0) target = $region21
    $region20: #{tpu_custom_call.1} parent=1 // pred_region
      %40 = dma.done [#allocation6], 16384
    $region21: #{tpu_custom_call.1} parent=1 // pred_fallthru
      _
    %v41 = vld [vmem:[#allocation2] sm:$0xff]
    %v42 = vld [vmem:[#allocation2 + $0x8] sm:$0xff]
    %v43 = vld [vmem:[#allocation5] sm:$0xff]
    %v44 = vld [vmem:[#allocation5 + $0x8] sm:$0xff]
    %v45 = vld [vmem:[#allocation5 + $0x10] sm:$0xff]
    %v46 = vld [vmem:[#allocation5 + $0x18] sm:$0xff]
    %v47 = vld [vmem:[#allocation5 + $0x20] sm:$0xff]
    %v48 = vld [vmem:[#allocation5 + $0x28] sm:$0xff]
    %v49 = vld [vmem:[#allocation5 + $0x30] sm:$0xff]
    %v50 = vld [vmem:[#allocation5 + $0x38] sm:$0xff]
    %v51 = vld [vmem:[#allocation5 + $0x40] sm:$0xff]
    %v52 = vld [vmem:[#allocation5 + $0x48] sm:$0xff]
    %v53 = vld [vmem:[#allocation5 + $0x50] sm:$0xff]
    %v54 = vld [vmem:[#allocation5 + $0x58] sm:$0xff]
    %v55 = vld [vmem:[#allocation5 + $0x60] sm:$0xff]
    %v56 = vld [vmem:[#allocation5 + $0x68] sm:$0xff]
    %v57 = vld [vmem:[#allocation5 + $0x70] sm:$0xff]
    %v58 = vld [vmem:[#allocation5 + $0x78] sm:$0xff]
    %v59 = vld [vmem:[#allocation5 + $0x80] sm:$0xff]
    %v60 = vld [vmem:[#allocation5 + $0x88] sm:$0xff]
    %v61 = vld [vmem:[#allocation5 + $0x90] sm:$0xff]
    %v62 = vld [vmem:[#allocation5 + $0x98] sm:$0xff]
    %v63 = vld [vmem:[#allocation5 + $0xa0] sm:$0xff]
    %v64 = vld [vmem:[#allocation5 + $0xa8] sm:$0xff]
    %v65 = vld [vmem:[#allocation5 + $0xb0] sm:$0xff]
    %v66 = vld [vmem:[#allocation5 + $0xb8] sm:$0xff]
    %v67 = vld [vmem:[#allocation5 + $0xc0] sm:$0xff]
    %v68 = vld [vmem:[#allocation5 + $0xc8] sm:$0xff]
    %v69 = vld [vmem:[#allocation5 + $0xd0] sm:$0xff]
    %v70 = vld [vmem:[#allocation5 + $0xd8] sm:$0xff]
    %v71 = vld [vmem:[#allocation5 + $0xe0] sm:$0xff]
    %v72 = vld [vmem:[#allocation5 + $0xe8] sm:$0xff]
    %v73 = vld [vmem:[#allocation5 + $0xf0] sm:$0xff]
    %v74 = vld [vmem:[#allocation5 + $0xf8] sm:$0xff]
    %v75 = vld [vmem:[#allocation5 + $0x100] sm:$0xff]
    %v76 = vld [vmem:[#allocation5 + $0x108] sm:$0xff]
    %v77 = vld [vmem:[#allocation5 + $0x110] sm:$0xff]
    %v78 = vld [vmem:[#allocation5 + $0x118] sm:$0xff]
    %v79 = vld [vmem:[#allocation5 + $0x120] sm:$0xff]
    %v80 = vld [vmem:[#allocation5 + $0x128] sm:$0xff]
    %v81 = vld [vmem:[#allocation5 + $0x130] sm:$0xff]
    %v82 = vld [vmem:[#allocation5 + $0x138] sm:$0xff]
    %v83 = vld [vmem:[#allocation5 + $0x140] sm:$0xff]
    %v84 = vld [vmem:[#allocation5 + $0x148] sm:$0xff]
    %v85 = vld [vmem:[#allocation5 + $0x150] sm:$0xff]
    %v86 = vld [vmem:[#allocation5 + $0x158] sm:$0xff]
    %v87 = vld [vmem:[#allocation5 + $0x160] sm:$0xff]
    %v88 = vld [vmem:[#allocation5 + $0x168] sm:$0xff]
    %v89 = vld [vmem:[#allocation5 + $0x170] sm:$0xff]
    %v90 = vld [vmem:[#allocation5 + $0x178] sm:$0xff]
    %v91 = vld [vmem:[#allocation5 + $0x180] sm:$0xff]
    %v92 = vld [vmem:[#allocation5 + $0x188] sm:$0xff]
    %v93 = vld [vmem:[#allocation5 + $0x190] sm:$0xff]
    %v94 = vld [vmem:[#allocation5 + $0x198] sm:$0xff]
    %v95 = vld [vmem:[#allocation5 + $0x1a0] sm:$0xff]
    %v96 = vld [vmem:[#allocation5 + $0x1a8] sm:$0xff]
    %v97 = vld [vmem:[#allocation5 + $0x1b0] sm:$0xff]
    %v98 = vld [vmem:[#allocation5 + $0x1b8] sm:$0xff]
    %v99 = vld [vmem:[#allocation5 + $0x1c0] sm:$0xff]
    %v100 = vld [vmem:[#allocation5 + $0x1c8] sm:$0xff]
    %v101 = vld [vmem:[#allocation5 + $0x1d0] sm:$0xff]
    %v102 = vld [vmem:[#allocation5 + $0x1d8] sm:$0xff]
    %v103 = vld [vmem:[#allocation5 + $0x1e0] sm:$0xff]
    %v104 = vld [vmem:[#allocation5 + $0x1e8] sm:$0xff]
    %v105 = vld [vmem:[#allocation5 + $0x1f0] sm:$0xff]
    %v106 = vld [vmem:[#allocation5 + $0x1f8] sm:$0xff]
    %v107 = vld [vmem:[#allocation5 + $0x200] sm:$0xff]
    %v108 = vld [vmem:[#allocation5 + $0x208] sm:$0xff]
    %v109 = vld [vmem:[#allocation5 + $0x210] sm:$0xff]
    %v110 = vld [vmem:[#allocation5 + $0x218] sm:$0xff]
    %v111 = vld [vmem:[#allocation5 + $0x220] sm:$0xff]
    %v112 = vld [vmem:[#allocation5 + $0x228] sm:$0xff]
    %v113 = vld [vmem:[#allocation5 + $0x230] sm:$0xff]
    %v114 = vld [vmem:[#allocation5 + $0x238] sm:$0xff]
    %v115 = vld [vmem:[#allocation5 + $0x240] sm:$0xff]
    %v116 = vld [vmem:[#allocation5 + $0x248] sm:$0xff]
    %v117 = vld [vmem:[#allocation5 + $0x250] sm:$0xff]
    %v118 = vld [vmem:[#allocation5 + $0x258] sm:$0xff]
    %v119 = vld [vmem:[#allocation5 + $0x260] sm:$0xff]
    %v120 = vld [vmem:[#allocation5 + $0x268] sm:$0xff]
    %v121 = vld [vmem:[#allocation5 + $0x270] sm:$0xff]
    %v122 = vld [vmem:[#allocation5 + $0x278] sm:$0xff]
    %v123 = vld [vmem:[#allocation5 + $0x280] sm:$0xff]
    %v124 = vld [vmem:[#allocation5 + $0x288] sm:$0xff]
    %v125 = vld [vmem:[#allocation5 + $0x290] sm:$0xff]
    %v126 = vld [vmem:[#allocation5 + $0x298] sm:$0xff]
    %v127 = vld [vmem:[#allocation5 + $0x2a0] sm:$0xff]
    %v128 = vld [vmem:[#allocation5 + $0x2a8] sm:$0xff]
    %v129 = vld [vmem:[#allocation5 + $0x2b0] sm:$0xff]
    %v130 = vld [vmem:[#allocation5 + $0x2b8] sm:$0xff]
    %v131 = vld [vmem:[#allocation5 + $0x2c0] sm:$0xff]
    %v132 = vld [vmem:[#allocation5 + $0x2c8] sm:$0xff]
    %v133 = vld [vmem:[#allocation5 + $0x2d0] sm:$0xff]
    %v134 = vld [vmem:[#allocation5 + $0x2d8] sm:$0xff]
    %v135 = vld [vmem:[#allocation5 + $0x2e0] sm:$0xff]
    %v136 = vld [vmem:[#allocation5 + $0x2e8] sm:$0xff]
    %v137 = vld [vmem:[#allocation5 + $0x2f0] sm:$0xff]
    %v138 = vld [vmem:[#allocation5 + $0x2f8] sm:$0xff]
    %v139 = vld [vmem:[#allocation5 + $0x300] sm:$0xff]
    %v140 = vld [vmem:[#allocation5 + $0x308] sm:$0xff]
    %v141 = vld [vmem:[#allocation5 + $0x310] sm:$0xff]
    %v142 = vld [vmem:[#allocation5 + $0x318] sm:$0xff]
    %v143 = vld [vmem:[#allocation5 + $0x320] sm:$0xff]
    %v144 = vld [vmem:[#allocation5 + $0x328] sm:$0xff]
    %v145 = vld [vmem:[#allocation5 + $0x330] sm:$0xff]
    %v146 = vld [vmem:[#allocation5 + $0x338] sm:$0xff]
    %v147 = vld [vmem:[#allocation5 + $0x340] sm:$0xff]
    %v148 = vld [vmem:[#allocation5 + $0x348] sm:$0xff]
    %v149 = vld [vmem:[#allocation5 + $0x350] sm:$0xff]
    %v150 = vld [vmem:[#allocation5 + $0x358] sm:$0xff]
    %v151 = vld [vmem:[#allocation5 + $0x360] sm:$0xff]
    %v152 = vld [vmem:[#allocation5 + $0x368] sm:$0xff]
    %v153 = vld [vmem:[#allocation5 + $0x370] sm:$0xff]
    %v154 = vld [vmem:[#allocation5 + $0x378] sm:$0xff]
    %v155 = vld [vmem:[#allocation5 + $0x380] sm:$0xff]
    %v156 = vld [vmem:[#allocation5 + $0x388] sm:$0xff]
    %v157 = vld [vmem:[#allocation5 + $0x390] sm:$0xff]
    %v158 = vld [vmem:[#allocation5 + $0x398] sm:$0xff]
    %v159 = vld [vmem:[#allocation5 + $0x3a0] sm:$0xff]
    %v160 = vld [vmem:[#allocation5 + $0x3a8] sm:$0xff]
    %v161 = vld [vmem:[#allocation5 + $0x3b0] sm:$0xff]
    %v162 = vld [vmem:[#allocation5 + $0x3b8] sm:$0xff]
    %v163 = vld [vmem:[#allocation5 + $0x3c0] sm:$0xff]
    %v164 = vld [vmem:[#allocation5 + $0x3c8] sm:$0xff]
    %v165 = vld [vmem:[#allocation5 + $0x3d0] sm:$0xff]
    %v166 = vld [vmem:[#allocation5 + $0x3d8] sm:$0xff]
    %v167 = vld [vmem:[#allocation5 + $0x3e0] sm:$0xff]
    %v168 = vld [vmem:[#allocation5 + $0x3e8] sm:$0xff]
    %v169 = vld [vmem:[#allocation5 + $0x3f0] sm:$0xff]
    %v170 = vld [vmem:[#allocation5 + $0x3f8] sm:$0xff]
    %v171 = vld [vmem:[%s2] sm:$0x1]
    %v173 = vlaneseq
    %v174 = vshrl.u32 %v173, 7
    %v175 = vsub.s32 0, %v174
    %v176 = vrot.slane %v171, %v175
    %v180 = vcombine.high %v41, %v41
    %v182 = vunpack.c.l.s4 1983009808
    %v183 = vunpack.c.0.s8 %v182
    %v184 = vlaneseq
    %v185 = vshrl.u32 %v184, 7
    %v186 = vsub.s32 %v183, %v185
    %v187 = vrot.slane %v41, %v186
    %v189 = vunpack.c.l.s4 1983009808
    %v190 = vunpack.c.0.s8 %v189
    %v191 = vlaneseq
    %v192 = vshrl.u32 %v191, 7
    %v193 = vsub.s32 %v190, %v192
    %v194 = vrot.slane %v180, %v193
    %v195 = vcombine.high %v187, %v187
    %v196 = vcombine.high %v194, %v194
    %v197 = vcombine.high %v42, %v42
    %v199 = vunpack.c.l.s4 1983009808
    %v200 = vunpack.c.0.s8 %v199
    %v201 = vlaneseq
    %v202 = vshrl.u32 %v201, 7
    %v203 = vsub.s32 %v200, %v202
    %v204 = vrot.slane %v42, %v203
    %v206 = vunpack.c.l.s4 1983009808
    %v207 = vunpack.c.0.s8 %v206
    %v208 = vlaneseq
    %v209 = vshrl.u32 %v208, 7
    %v210 = vsub.s32 %v207, %v209
    %v211 = vrot.slane %v197, %v210
    %v212 = vcombine.high %v204, %v204
    %v213 = vcombine.high %v211, %v211
    %222 = vmatprep.subr.mxu0 0.0
    %223 = vmatpush1.msra.mxu0 %v43
    %224 = vmatprep.subr.mxu0 0.0
    %225 = vmatpush1.msra.mxu0 %v44
    %226 = vmatprep.subr.mxu0 0.0
    %227 = vmatpush1.msra.mxu0 %v45
    %228 = vmatprep.subr.mxu0 0.0
    %229 = vmatpush1.msra.mxu0 %v46
    %230 = vmatprep.subr.mxu0 0.0
    %231 = vmatpush1.msra.mxu0 %v47
    %232 = vmatprep.subr.mxu0 0.0
    %233 = vmatpush1.msra.mxu0 %v48
    %234 = vmatprep.subr.mxu0 0.0
    %235 = vmatpush1.msra.mxu0 %v49
    %236 = vmatprep.subr.mxu0 0.0
    %237 = vmatpush1.msra.mxu0 %v50
    %238 = vmatprep.subr.mxu0 0.0
    %239 = vmatpush1.msra.mxu0 %v51
    %240 = vmatprep.subr.mxu0 0.0
    %241 = vmatpush1.msra.mxu0 %v52
    %242 = vmatprep.subr.mxu0 0.0
    %243 = vmatpush1.msra.mxu0 %v53
    %244 = vmatprep.subr.mxu0 0.0
    %245 = vmatpush1.msra.mxu0 %v54
    %246 = vmatprep.subr.mxu0 0.0
    %247 = vmatpush1.msra.mxu0 %v55
    %248 = vmatprep.subr.mxu0 0.0
    %249 = vmatpush1.msra.mxu0 %v56
    %250 = vmatprep.subr.mxu0 0.0
    %251 = vmatpush1.msra.mxu0 %v57
    %252 = vmatprep.subr.mxu0 0.0
    %253 = vmatpush1.msra.mxu0 %v58
    %254 = vmatprep.subr.mxu0 0.0
    %255 = vmatpush1.msra.mxu0 %v59
    %256 = vmatprep.subr.mxu0 0.0
    %257 = vmatpush1.msra.mxu0 %v60
    %258 = vmatprep.subr.mxu0 0.0
    %259 = vmatpush1.msra.mxu0 %v61
    %260 = vmatprep.subr.mxu0 0.0
    %261 = vmatpush1.msra.mxu0 %v62
    %262 = vmatprep.subr.mxu0 0.0
    %263 = vmatpush1.msra.mxu0 %v63
    %264 = vmatprep.subr.mxu0 0.0
    %265 = vmatpush1.msra.mxu0 %v64
    %266 = vmatprep.subr.mxu0 0.0
    %267 = vmatpush1.msra.mxu0 %v65
    %268 = vmatprep.subr.mxu0 0.0
    %269 = vmatpush1.msra.mxu0 %v66
    %270 = vmatprep.subr.mxu0 0.0
    %271 = vmatpush1.msra.mxu0 %v67
    %272 = vmatprep.subr.mxu0 0.0
    %273 = vmatpush1.msra.mxu0 %v68
    %274 = vmatprep.subr.mxu0 0.0
    %275 = vmatpush1.msra.mxu0 %v69
    %276 = vmatprep.subr.mxu0 0.0
    %277 = vmatpush1.msra.mxu0 %v70
    %278 = vmatprep.subr.mxu0 0.0
    %279 = vmatpush1.msra.mxu0 %v71
    %280 = vmatprep.subr.mxu0 0.0
    %281 = vmatpush1.msra.mxu0 %v72
    %282 = vmatprep.subr.mxu0 0.0
    %283 = vmatpush1.msra.mxu0 %v73
    %284 = vmatprep.subr.mxu0 0.0
    %285 = vmatpush1.msra.mxu0 %v74
    %286 = vmatprep.mubr.f32.mxu0 %v195
    %287 = vmatmul.mubr.f32.gmra.mrb[0].mxu0 %v187
    %v288 = vpop.f32.mrb[0].mxu0
    %v289 = vadd.f32 %v176, %v288
    %v290 = vpop.f32.mrb[0].mxu0
    %291 = vdwg.mxu0
    %292 = vmatprep.subr.mxu0 0.0
    %293 = vmatpush1.msra.mxu0 %v75
    %294 = vmatprep.subr.mxu0 0.0
    %295 = vmatpush1.msra.mxu0 %v76
    %296 = vmatprep.subr.mxu0 0.0
    %297 = vmatpush1.msra.mxu0 %v77
    %298 = vmatprep.subr.mxu0 0.0
    %299 = vmatpush1.msra.mxu0 %v78
    %300 = vmatprep.subr.mxu0 0.0
    %301 = vmatpush1.msra.mxu0 %v79
    %302 = vmatprep.subr.mxu0 0.0
    %303 = vmatpush1.msra.mxu0 %v80
    %304 = vmatprep.subr.mxu0 0.0
    %305 = vmatpush1.msra.mxu0 %v81
    %306 = vmatprep.subr.mxu0 0.0
    %307 = vmatpush1.msra.mxu0 %v82
    %308 = vmatprep.subr.mxu0 0.0
    %309 = vmatpush1.msra.mxu0 %v83
    %310 = vmatprep.subr.mxu0 0.0
    %311 = vmatpush1.msra.mxu0 %v84
    %312 = vmatprep.subr.mxu0 0.0
    %313 = vmatpush1.msra.mxu0 %v85
    %314 = vmatprep.subr.mxu0 0.0
    %315 = vmatpush1.msra.mxu0 %v86
    %316 = vmatprep.subr.mxu0 0.0
    %317 = vmatpush1.msra.mxu0 %v87
    %318 = vmatprep.subr.mxu0 0.0
    %319 = vmatpush1.msra.mxu0 %v88
    %320 = vmatprep.subr.mxu0 0.0
    %321 = vmatpush1.msra.mxu0 %v89
    %322 = vmatprep.subr.mxu0 0.0
    %323 = vmatpush1.msra.mxu0 %v90
    %324 = vmatprep.subr.mxu0 0.0
    %325 = vmatpush1.msra.mxu0 %v91
    %326 = vmatprep.subr.mxu0 0.0
    %327 = vmatpush1.msra.mxu0 %v92
    %328 = vmatprep.subr.mxu0 0.0
    %329 = vmatpush1.msra.mxu0 %v93
    %330 = vmatprep.subr.mxu0 0.0
    %331 = vmatpush1.msra.mxu0 %v94
    %332 = vmatprep.subr.mxu0 0.0
    %333 = vmatpush1.msra.mxu0 %v95
    %334 = vmatprep.subr.mxu0 0.0
    %335 = vmatpush1.msra.mxu0 %v96
    %336 = vmatprep.subr.mxu0 0.0
    %337 = vmatpush1.msra.mxu0 %v97
    %338 = vmatprep.subr.mxu0 0.0
    %339 = vmatpush1.msra.mxu0 %v98
    %340 = vmatprep.subr.mxu0 0.0
    %341 = vmatpush1.msra.mxu0 %v99
    %342 = vmatprep.subr.mxu0 0.0
    %343 = vmatpush1.msra.mxu0 %v100
    %344 = vmatprep.subr.mxu0 0.0
    %345 = vmatpush1.msra.mxu0 %v101
    %346 = vmatprep.subr.mxu0 0.0
    %347 = vmatpush1.msra.mxu0 %v102
    %348 = vmatprep.subr.mxu0 0.0
    %349 = vmatpush1.msra.mxu0 %v103
    %350 = vmatprep.subr.mxu0 0.0
    %351 = vmatpush1.msra.mxu0 %v104
    %352 = vmatprep.subr.mxu0 0.0
    %353 = vmatpush1.msra.mxu0 %v105
    %354 = vmatprep.subr.mxu0 0.0
    %355 = vmatpush1.msra.mxu0 %v106
    %356 = vmatprep.mubr.f32.mxu0 %v196
    %357 = vmatmul.mubr.f32.gmra.mrb[0].mxu0 %v194
    %v358 = vpop.f32.mrb[0].mxu0
    %v359 = vadd.f32 %v289, %v358
    %v360 = vpop.f32.mrb[0].mxu0
    %361 = vdwg.mxu0
    %362 = vmatprep.subr.mxu0 0.0
    %363 = vmatpush1.msra.mxu0 %v107
    %364 = vmatprep.subr.mxu0 0.0
    %365 = vmatpush1.msra.mxu0 %v108
    %366 = vmatprep.subr.mxu0 0.0
    %367 = vmatpush1.msra.mxu0 %v109
    %368 = vmatprep.subr.mxu0 0.0
    %369 = vmatpush1.msra.mxu0 %v110
    %370 = vmatprep.subr.mxu0 0.0
    %371 = vmatpush1.msra.mxu0 %v111
    %372 = vmatprep.subr.mxu0 0.0
    %373 = vmatpush1.msra.mxu0 %v112
    %374 = vmatprep.subr.mxu0 0.0
    %375 = vmatpush1.msra.mxu0 %v113
    %376 = vmatprep.subr.mxu0 0.0
    %377 = vmatpush1.msra.mxu0 %v114
    %378 = vmatprep.subr.mxu0 0.0
    %379 = vmatpush1.msra.mxu0 %v115
    %380 = vmatprep.subr.mxu0 0.0
    %381 = vmatpush1.msra.mxu0 %v116
    %382 = vmatprep.subr.mxu0 0.0
    %383 = vmatpush1.msra.mxu0 %v117
    %384 = vmatprep.subr.mxu0 0.0
    %385 = vmatpush1.msra.mxu0 %v118
    %386 = vmatprep.subr.mxu0 0.0
    %387 = vmatpush1.msra.mxu0 %v119
    %388 = vmatprep.subr.mxu0 0.0
    %389 = vmatpush1.msra.mxu0 %v120
    %390 = vmatprep.subr.mxu0 0.0
    %391 = vmatpush1.msra.mxu0 %v121
    %392 = vmatprep.subr.mxu0 0.0
    %393 = vmatpush1.msra.mxu0 %v122
    %394 = vmatprep.subr.mxu0 0.0
    %395 = vmatpush1.msra.mxu0 %v123
    %396 = vmatprep.subr.mxu0 0.0
    %397 = vmatpush1.msra.mxu0 %v124
    %398 = vmatprep.subr.mxu0 0.0
    %399 = vmatpush1.msra.mxu0 %v125
    %400 = vmatprep.subr.mxu0 0.0
    %401 = vmatpush1.msra.mxu0 %v126
    %402 = vmatprep.subr.mxu0 0.0
    %403 = vmatpush1.msra.mxu0 %v127
    %404 = vmatprep.subr.mxu0 0.0
    %405 = vmatpush1.msra.mxu0 %v128
    %406 = vmatprep.subr.mxu0 0.0
    %407 = vmatpush1.msra.mxu0 %v129
    %408 = vmatprep.subr.mxu0 0.0
    %409 = vmatpush1.msra.mxu0 %v130
    %410 = vmatprep.subr.mxu0 0.0
    %411 = vmatpush1.msra.mxu0 %v131
    %412 = vmatprep.subr.mxu0 0.0
    %413 = vmatpush1.msra.mxu0 %v132
    %414 = vmatprep.subr.mxu0 0.0
    %415 = vmatpush1.msra.mxu0 %v133
    %416 = vmatprep.subr.mxu0 0.0
    %417 = vmatpush1.msra.mxu0 %v134
    %418 = vmatprep.subr.mxu0 0.0
    %419 = vmatpush1.msra.mxu0 %v135
    %420 = vmatprep.subr.mxu0 0.0
    %421 = vmatpush1.msra.mxu0 %v136
    %422 = vmatprep.subr.mxu0 0.0
    %423 = vmatpush1.msra.mxu0 %v137
    %424 = vmatprep.subr.mxu0 0.0
    %425 = vmatpush1.msra.mxu0 %v138
    %426 = vmatprep.mubr.f32.mxu0 %v212
    %427 = vmatmul.mubr.f32.gmra.mrb[0].mxu0 %v204
    %v428 = vpop.f32.mrb[0].mxu0
    %v429 = vadd.f32 %v359, %v428
    %v430 = vpop.f32.mrb[0].mxu0
    %431 = vdwg.mxu0
    %432 = vmatprep.subr.mxu0 0.0
    %433 = vmatpush1.msra.mxu0 %v139
    %434 = vmatprep.subr.mxu0 0.0
    %435 = vmatpush1.msra.mxu0 %v140
    %436 = vmatprep.subr.mxu0 0.0
    %437 = vmatpush1.msra.mxu0 %v141
    %438 = vmatprep.subr.mxu0 0.0
    %439 = vmatpush1.msra.mxu0 %v142
    %440 = vmatprep.subr.mxu0 0.0
    %441 = vmatpush1.msra.mxu0 %v143
    %442 = vmatprep.subr.mxu0 0.0
    %443 = vmatpush1.msra.mxu0 %v144
    %444 = vmatprep.subr.mxu0 0.0
    %445 = vmatpush1.msra.mxu0 %v145
    %446 = vmatprep.subr.mxu0 0.0
    %447 = vmatpush1.msra.mxu0 %v146
    %448 = vmatprep.subr.mxu0 0.0
    %449 = vmatpush1.msra.mxu0 %v147
    %450 = vmatprep.subr.mxu0 0.0
    %451 = vmatpush1.msra.mxu0 %v148
    %452 = vmatprep.subr.mxu0 0.0
    %453 = vmatpush1.msra.mxu0 %v149
    %454 = vmatprep.subr.mxu0 0.0
    %455 = vmatpush1.msra.mxu0 %v150
    %456 = vmatprep.subr.mxu0 0.0
    %457 = vmatpush1.msra.mxu0 %v151
    %458 = vmatprep.subr.mxu0 0.0
    %459 = vmatpush1.msra.mxu0 %v152
    %460 = vmatprep.subr.mxu0 0.0
    %461 = vmatpush1.msra.mxu0 %v153
    %462 = vmatprep.subr.mxu0 0.0
    %463 = vmatpush1.msra.mxu0 %v154
    %464 = vmatprep.subr.mxu0 0.0
    %465 = vmatpush1.msra.mxu0 %v155
    %466 = vmatprep.subr.mxu0 0.0
    %467 = vmatpush1.msra.mxu0 %v156
    %468 = vmatprep.subr.mxu0 0.0
    %469 = vmatpush1.msra.mxu0 %v157
    %470 = vmatprep.subr.mxu0 0.0
    %471 = vmatpush1.msra.mxu0 %v158
    %472 = vmatprep.subr.mxu0 0.0
    %473 = vmatpush1.msra.mxu0 %v159
    %474 = vmatprep.subr.mxu0 0.0
    %475 = vmatpush1.msra.mxu0 %v160
    %476 = vmatprep.subr.mxu0 0.0
    %477 = vmatpush1.msra.mxu0 %v161
    %478 = vmatprep.subr.mxu0 0.0
    %479 = vmatpush1.msra.mxu0 %v162
    %480 = vmatprep.subr.mxu0 0.0
    %481 = vmatpush1.msra.mxu0 %v163
    %482 = vmatprep.subr.mxu0 0.0
    %483 = vmatpush1.msra.mxu0 %v164
    %484 = vmatprep.subr.mxu0 0.0
    %485 = vmatpush1.msra.mxu0 %v165
    %486 = vmatprep.subr.mxu0 0.0
    %487 = vmatpush1.msra.mxu0 %v166
    %488 = vmatprep.subr.mxu0 0.0
    %489 = vmatpush1.msra.mxu0 %v167
    %490 = vmatprep.subr.mxu0 0.0
    %491 = vmatpush1.msra.mxu0 %v168
    %492 = vmatprep.subr.mxu0 0.0
    %493 = vmatpush1.msra.mxu0 %v169
    %494 = vmatprep.subr.mxu0 0.0
    %495 = vmatpush1.msra.mxu0 %v170
    %496 = vmatprep.mubr.f32.mxu0 %v213
    %497 = vmatmul.mubr.f32.gmra.mrb[0].mxu0 %v211
    %v498 = vpop.f32.mrb[0].mxu0
    %v499 = vadd.f32 %v429, %v498
    %v500 = vpop.f32.mrb[0].mxu0
    %501 = vdwg.mxu0
    %vm502 = vcmask 1041408
    %v503 = vsel %vm502, %v499, -inf
    %504 = vmax.xlane.f32.xlu0 %v503
    %v505 = vpop.xlane.xlu0 %504
    %v506 = vsub.f32 %v499, %v505
    %v507 = vmul.f32 %v506, 1.442695
    %v508 = vpow.pop %v507
    %v509 = vsel %vm502, %v508, 0.0
    %510 = vadd.xlane.f32.xlu0 %v509
    %v511 = vpop.xlane.xlu0 %510
    %v512 = vrcp.pop %v511
    %v513 = vmul.f32 %v508, %v512
    %514 = vst [vmem:[#allocation7] sm:$0x3] %v513
    // Predicated region
    $region22: #{tpu_custom_call.1} parent=1 // pred_check
      _
    $region23: #{tpu_custom_call.1} parent=1 // pred_check_branch
      %516 = sbr.rel (0) target = $region25
    $region24: #{tpu_custom_call.1} parent=1 // pred_region
      %s518 = ssub.s32 32, 32
      %519 = vsyncadd [#allocation4], %s518
      %s521 = sshll.u32 [#allocation7], 4
      %s522 = int_to_ptr.vmem [resolvable:$true] %s521
      %524 = dma.vmem_to_hbm [thread:$0]  %s522, 32, %s3, [#allocation4]
    $region25: #{tpu_custom_call.1} parent=1 // pred_fallthru
      _
    // Predicated region
    $region26: #{tpu_custom_call.1} parent=1 // pred_check
      _
    $region27: #{tpu_custom_call.1} parent=1 // pred_check_branch
      %526 = sbr.rel (0) target = $region29
    $region28: #{tpu_custom_call.1} parent=1 // pred_region
      %527 = dma.done [#allocation4], 32
    $region29: #{tpu_custom_call.1} parent=1 // pred_fallthru
      _
    %528 = vsyncpa [#allocation3], 1
    %529 = vsyncpa [#allocation6], 1
    %530 = vsyncpa [#allocation4], 1

</llo_original>
